<compile_context>
chip_gen: v5e
topology: v5e:2x2
jax: 0.10.0
libtpu: 0.0.40
codegen_flags: <defaults>
</compile_context>

<pallas_src>
import functools
import math

import jax
import jax.numpy as jnp
from jax.experimental import pallas as pl
from jax.experimental.pallas import tpu as pltpu


def _lcm(a, b):
    return a * b // math.gcd(a, b)


def _round_up(x, m):
    return ((x + m - 1) // m) * m


def _conv_kernel(x_ref, halo_ref, w_ref, *rest, KH, KW, TH, W_out,
                 use_relu, use_bias):
    # x_ref    : (1, TH, Wp, Cin)           main row strip of the padded image
    # halo_ref : (1, max(KH-1,1), Wp, Cin)  rows just below the strip
    # w_ref    : (KH*KW*Cin, COUT_TILE)     folded weights for one Cout tile
    # b_ref    : (1, COUT_TILE)             optional, f32
    # o_ref    : (1, TH*W_out, COUT_TILE)   lane-dense output block
    if use_bias:
        b_ref, o_ref = rest
    else:
        (o_ref,) = rest

    x_main = x_ref[0]                                            # (TH, Wp, Cin)
    if KH > 1:
        x_strip = jnp.concatenate([x_main, halo_ref[0]], axis=0)  # (TH+KH-1, Wp, Cin)
    else:
        x_strip = x_main

    # Fold (KH, KW, Cin) into one contraction axis -> a single MXU matmul.
    pieces = []
    for kh in range(KH):
        for kw in range(KW):
            pieces.append(x_strip[kh:kh + TH, kw:kw + W_out, :])  # (TH, W_out, Cin)
    slab = pieces[0] if len(pieces) == 1 else jnp.concatenate(pieces, axis=-1)
    slab = slab.reshape(TH * W_out, slab.shape[-1])              # (TH*W_out, KH*KW*Cin)

    acc = jnp.dot(slab, w_ref[...], preferred_element_type=jnp.float32)
    if use_bias:
        acc = acc + b_ref[...]                                   # (1, COUT_TILE) broadcast
    if use_relu:
        acc = jnp.maximum(acc, 0.0)
    o_ref[0] = acc.astype(o_ref.dtype)


def conv2d_pallas(x_nchw, weight, bias=None, *, use_relu=True, padding=True,
                  compute_dtype=None):
    """Forward of the PyTorch Conv2d module (stride=1, dilation=1, groups=1,
    use_bn=False): conv + optional bias + optional ReLU.

    x_nchw : (N, Cin, H, W)
    weight : (Cout, Cin, KH, KW)   PyTorch OIHW layout
    bias   : (Cout,) or None
    compute_dtype : optional operand dtype for the matmul (e.g. jnp.bfloat16
        on v6e/v7x); accumulation is always f32, output keeps x's dtype.
    returns: (N, Cout, H_out, W_out)
    """
    N, Cin, H, W = x_nchw.shape
    Cout, Cin_w, KH, KW = weight.shape
    assert Cin_w == Cin, (Cin_w, Cin)
    # TODO(synk): stride>1, dilation>1, groups>1 and the BatchNorm branch are
    # not implemented (module defaults: stride=1, dilation=1, groups=1,
    # use_bn=False).
    pad = (KH - 1) // 2 if padding else 0

    out_dtype = x_nchw.dtype
    cdt = jnp.dtype(compute_dtype) if compute_dtype is not None else jnp.dtype(out_dtype)
    in_item = cdt.itemsize
    out_item = jnp.dtype(out_dtype).itemsize

    H_out = H + 2 * pad - KH + 1
    W_out = W + 2 * pad - KW + 1
    Wp = W + 2 * pad
    K2C = KH * KW * Cin

    COUT_TILE = 128                                 # lane-dense, v5e-friendly
    Cout_pad = _round_up(Cout, COUT_TILE)
    n_ct = Cout_pad // COUT_TILE

    # Row-tile size: a multiple of the halo height (so the halo block sits on a
    # block boundary), TH*W_out a multiple of 8 (sublane-dense output blocks),
    # shrunk if the double-buffered per-step footprint would blow VMEM
    # (v7x: 64 MiB physical).
    halo = max(KH - 1, 1)
    unit = _lcm(halo, 8 // math.gcd(W_out, 8))
    TH = unit * (-(-8 // unit))                     # target ~8 output rows/tile
    TH = min(TH, _round_up(H_out, unit))

    def _step_bytes(th):
        x_blk = th * Wp * Cin * in_item
        h_blk = halo * Wp * Cin * in_item
        w_blk = K2C * COUT_TILE * in_item
        b_blk = COUT_TILE * 4
        o_blk = th * W_out * COUT_TILE * out_item
        live = th * W_out * (K2C * in_item + COUT_TILE * 4)   # slab + f32 acc
        return 2 * (x_blk + h_blk + w_blk + b_blk + o_blk) + live

    while TH > unit and _step_bytes(TH) > (40 << 20):
        TH -= unit

    R = -(-H_out // TH)                             # number of row tiles
    Hp_pad = (R + 1) * TH                           # padded rows: divisible by
                                                    # both TH and the halo size

    # ---- wrapper-side layout plumbing -------------------------------------
    # TODO(synk): fold the zero-padding into the kernel (predicated edge tiles)
    # to avoid the extra HBM pass that jnp.pad costs.
    x = jnp.transpose(x_nchw, (0, 2, 3, 1)).astype(cdt)               # NHWC
    x = jnp.pad(x, ((0, 0), (pad, Hp_pad - pad - H), (pad, pad), (0, 0)))

    # OIHW -> HWIO -> folded (KH*KW*Cin, Cout_pad) contraction matrix.
    w = jnp.transpose(weight, (2, 3, 1, 0)).reshape(K2C, Cout)
    w = jnp.pad(w, ((0, 0), (0, Cout_pad - Cout))).astype(cdt)

    use_bias = bias is not None
    operands = [x, x, w]                 # x twice: main strip + halo views
    in_specs = [
        pl.BlockSpec((1, TH, Wp, Cin), lambda n, r, c: (n, r, 0, 0)),
        pl.BlockSpec((1, halo, Wp, Cin),
                     (lambda n, r, c: (n, (r + 1) * (TH // halo), 0, 0))
                     if KH > 1 else
                     (lambda n, r, c: (n, 0, 0, 0))),
        pl.BlockSpec((K2C, COUT_TILE), lambda n, r, c: (0, c)),
        # TODO(synk): consider pipeline_mode=pl.Buffered(3) on the strip spec
        # once exposed-DMA time is measured on the HBM-bound path.
    ]
    if use_bias:
        b = jnp.pad(bias.astype(jnp.float32), (0, Cout_pad - Cout)).reshape(1, Cout_pad)
        operands.append(b)
        in_specs.append(pl.BlockSpec((1, COUT_TILE), lambda n, r, c: (0, c)))

    kernel = functools.partial(
        _conv_kernel, KH=KH, KW=KW, TH=TH, W_out=W_out,
        use_relu=use_relu, use_bias=use_bias)

    flops = 2 * N * R * TH * W_out * K2C * Cout_pad
    bytes_accessed = (N * Hp_pad * Wp * Cin * in_item
                      + K2C * Cout_pad * in_item
                      + N * R * TH * W_out * Cout_pad * out_item)

    out_flat = pl.pallas_call(
        kernel,
        out_shape=jax.ShapeDtypeStruct((N, R * TH * W_out, Cout_pad), out_dtype),
        grid_spec=pltpu.PrefetchScalarGridSpec(
            num_scalar_prefetch=0,
            grid=(N, R, n_ct),
            in_specs=in_specs,
            out_specs=pl.BlockSpec((1, TH * W_out, COUT_TILE),
                                   lambda n, r, c: (n, r, c)),
        ),
        compiler_params=pltpu.CompilerParams(
            dimension_semantics=("parallel", "parallel", "arbitrary"),
            vmem_limit_bytes=int(min(max(_step_bytes(TH) + (8 << 20), 32 << 20),
                                     64 << 20)),
        ),
        cost_estimate=pl.CostEstimate(flops=flops, transcendentals=0,
                                      bytes_accessed=bytes_accessed),
    )(*operands)

    # (N, R*TH*W_out, Cout_pad) -> (N, Cout, H_out, W_out)
    out = out_flat.reshape(N, R * TH, W_out, Cout_pad)[:, :H_out, :, :Cout]
    return jnp.transpose(out, (0, 3, 1, 2))


def init_params(key, in_channel, out_channel, kernel_size,
                init="kaiming", init_std=0.01, init_bias=0.0, bias=True):
    """Deterministic parameter init mirroring the module's __init__."""
    wkey, _ = jax.random.split(key)
    shape = (out_channel, in_channel, kernel_size, kernel_size)
    if init == "kaiming":
        fan_in = in_channel * kernel_size * kernel_size
        std = math.sqrt(2.0 / fan_in)       # kaiming_normal, fan_in, a=0
    else:
        std = init_std
    weight = std * jax.random.normal(wkey, shape, dtype=jnp.float32)
    b = jnp.full((out_channel,), init_bias, dtype=jnp.float32) if bias else None
    return weight, b


if __name__ == "__main__":
    key = jax.random.PRNGKey(0)
    k_x, k_w = jax.random.split(key)

    N, Cin, H, W = 2, 4, 16, 16
    Cout, K = 8, 3

    x = jax.random.normal(k_x, (N, Cin, H, W), dtype=jnp.float32)
    weight, bias = init_params(k_w, Cin, Cout, K)

    # f32 path + numerical check against an XLA reference.
    out = conv2d_pallas(x, weight, bias, use_relu=True, padding=True)
    out = jax.block_until_ready(out)
    assert out.shape == (N, Cout, H, W), out.shape

    pad = (K - 1) // 2
    ref = jax.lax.conv_general_dilated(
        x, weight, window_strides=(1, 1), padding=((pad, pad), (pad, pad)),
        dimension_numbers=("NCHW", "OIHW", "NCHW"),
        precision=jax.lax.Precision.HIGHEST)
    ref = jnp.maximum(ref + bias.reshape(1, -1, 1, 1), 0.0)
    max_err = float(jnp.max(jnp.abs(out - ref)))
    assert max_err < 5e-2, max_err

    # bf16 operand path (v6e/v7x MXU-friendly); accumulation stays f32.
    out_bf16 = conv2d_pallas(x, weight, bias, use_relu=True, padding=True,
                             compute_dtype=jnp.bfloat16)
    out_bf16 = jax.block_until_ready(out_bf16)
    assert out_bf16.shape == (N, Cout, H, W), out_bf16.shape

    # no-bias / no-ReLU path (skips the bias DMA entirely).
    out_nb = conv2d_pallas(x, weight, None, use_relu=False, padding=True)
    out_nb = jax.block_until_ready(out_nb)
    assert out_nb.shape == (N, Cout, H, W), out_nb.shape

    print("KERNEL_OK")
</pallas_src>

<mosaic_0001>
module attributes {stable_mosaic.version = 11 : i64} {
  func.func @_conv_kernel(%arg0: i32, %arg1: i32, %arg2: i32, %arg3: memref<1x8x18x4xf32, #tpu.memory_space<vmem>>, %arg4: memref<1x2x18x4xf32, #tpu.memory_space<vmem>>, %arg5: memref<36x128xf32, #tpu.memory_space<vmem>>, %arg6: memref<1x128xf32, #tpu.memory_space<vmem>>, %arg7: memref<1x128x128xf32, #tpu.memory_space<vmem>>) attributes {dimension_semantics = [#tpu.dimension_semantics<parallel>, #tpu.dimension_semantics<parallel>, #tpu.dimension_semantics<arbitrary>], iteration_bounds = array<i64: 2, 2, 1>, scalar_prefetch = 0 : i64, scratch_operands = 0 : i64, tpu.core_type = #tpu.core_type<tc>, window_params = [{transform_indices = @transform_0, window_bounds = array<i64: 1, 8, 18, 4>}, {transform_indices = @transform_1, window_bounds = array<i64: 1, 2, 18, 4>}, {transform_indices = @transform_2, window_bounds = array<i64: 36, 128>}, {transform_indices = @transform_3, window_bounds = array<i64: 1, 128>}, {transform_indices = @transform_4, window_bounds = array<i64: 1, 128, 128>}]} {
    %c0 = arith.constant 0 : index
    %c0_0 = arith.constant 0 : index
    %c0_1 = arith.constant 0 : index
    %c0_2 = arith.constant 0 : index
    %0 = vector.load %arg3[%c0, %c0_0, %c0_1, %c0_2] : memref<1x8x18x4xf32, #tpu.memory_space<vmem>>, vector<1x8x18x4xf32>
    %1 = vector.shape_cast %0 : vector<1x8x18x4xf32> to vector<8x18x4xf32>
    %c0_3 = arith.constant 0 : index
    %c0_4 = arith.constant 0 : index
    %c0_5 = arith.constant 0 : index
    %c0_6 = arith.constant 0 : index
    %2 = vector.load %arg4[%c0_3, %c0_4, %c0_5, %c0_6] : memref<1x2x18x4xf32, #tpu.memory_space<vmem>>, vector<1x2x18x4xf32>
    %3 = vector.shape_cast %2 : vector<1x2x18x4xf32> to vector<2x18x4xf32>
    %4 = tpu.concatenate %1, %3 in 0 : vector<8x18x4xf32>, vector<2x18x4xf32> -> vector<10x18x4xf32>
    %5 = vector.extract_strided_slice %4 {offsets = [0, 0, 0], sizes = [8, 16, 4], strides = [1, 1, 1]} : vector<10x18x4xf32> to vector<8x16x4xf32>
    %6 = vector.extract_strided_slice %4 {offsets = [0, 1, 0], sizes = [8, 16, 4], strides = [1, 1, 1]} : vector<10x18x4xf32> to vector<8x16x4xf32>
    %7 = vector.extract_strided_slice %4 {offsets = [0, 2, 0], sizes = [8, 16, 4], strides = [1, 1, 1]} : vector<10x18x4xf32> to vector<8x16x4xf32>
    %8 = vector.extract_strided_slice %4 {offsets = [1, 0, 0], sizes = [8, 16, 4], strides = [1, 1, 1]} : vector<10x18x4xf32> to vector<8x16x4xf32>
    %9 = vector.extract_strided_slice %4 {offsets = [1, 1, 0], sizes = [8, 16, 4], strides = [1, 1, 1]} : vector<10x18x4xf32> to vector<8x16x4xf32>
    %10 = vector.extract_strided_slice %4 {offsets = [1, 2, 0], sizes = [8, 16, 4], strides = [1, 1, 1]} : vector<10x18x4xf32> to vector<8x16x4xf32>
    %11 = vector.extract_strided_slice %4 {offsets = [2, 0, 0], sizes = [8, 16, 4], strides = [1, 1, 1]} : vector<10x18x4xf32> to vector<8x16x4xf32>
    %12 = vector.extract_strided_slice %4 {offsets = [2, 1, 0], sizes = [8, 16, 4], strides = [1, 1, 1]} : vector<10x18x4xf32> to vector<8x16x4xf32>
    %13 = vector.extract_strided_slice %4 {offsets = [2, 2, 0], sizes = [8, 16, 4], strides = [1, 1, 1]} : vector<10x18x4xf32> to vector<8x16x4xf32>
    %14 = tpu.concatenate %5, %6, %7, %8, %9, %10, %11, %12, %13 in 2 : vector<8x16x4xf32>, vector<8x16x4xf32>, vector<8x16x4xf32>, vector<8x16x4xf32>, vector<8x16x4xf32>, vector<8x16x4xf32>, vector<8x16x4xf32>, vector<8x16x4xf32>, vector<8x16x4xf32> -> vector<8x16x36xf32>
    %15 = vector.shape_cast %14 : vector<8x16x36xf32> to vector<128x36xf32>
    %c0_7 = arith.constant 0 : index
    %c0_8 = arith.constant 0 : index
    %16 = vector.load %arg5[%c0_7, %c0_8] : memref<36x128xf32, #tpu.memory_space<vmem>>, vector<36x128xf32>
    %cst = arith.constant dense<0.000000e+00> : vector<128x128xf32>
    %17 = tpu.matmul %15, %16, %cst {dimension_numbers = #tpu.dot_dimension_numbers<[1], [0], [0], [1], [0, 0, 1, 1], [], []>} : vector<128x36xf32>, vector<36x128xf32>, vector<128x128xf32> -> vector<128x128xf32>
    %c0_9 = arith.constant 0 : index
    %c0_10 = arith.constant 0 : index
    %18 = vector.load %arg6[%c0_9, %c0_10] : memref<1x128xf32, #tpu.memory_space<vmem>>, vector<1x128xf32>
    %19 = vector.broadcast %18 : vector<1x128xf32> to vector<128x128xf32>
    %20 = arith.addf %17, %19 : vector<128x128xf32>
    %cst_11 = arith.constant 0.000000e+00 : f32
    %21 = vector.broadcast %cst_11 : f32 to vector<128x128xf32>
    %22 = arith.maximumf %20, %21 : vector<128x128xf32>
    %c0_12 = arith.constant 0 : index
    %c0_13 = arith.constant 0 : index
    %c0_14 = arith.constant 0 : index
    %23 = vector.load %arg7[%c0_12, %c0_13, %c0_14] : memref<1x128x128xf32, #tpu.memory_space<vmem>>, vector<1x128x128xf32>
    %24 = vector.shape_cast %23 : vector<1x128x128xf32> to vector<128x128xf32>
    %25 = vector.shape_cast %22 : vector<128x128xf32> to vector<1x128x128xf32>
    tpu.vector_store %arg7[%c0_12, %c0_13, %c0_14], %25 {strides = array<i32>} : memref<1x128x128xf32, #tpu.memory_space<vmem>>, vector<1x128x128xf32>,
    return
  }
  func.func @transform_0(%arg0: i32, %arg1: i32, %arg2: i32) -> (i32, i32, i32, i32) {
    %c0_i32 = arith.constant 0 : i32
    %c0_i32_0 = arith.constant 0 : i32
    %c0_i32_1 = arith.constant 0 : i32
    return %arg0, %arg1, %c0_i32, %c0_i32_0 : i32, i32, i32, i32
  }
  func.func @transform_1(%arg0: i32, %arg1: i32, %arg2: i32) -> (i32, i32, i32, i32) {
    %c1_i32 = arith.constant 1 : i32
    %0 = arith.addi %arg1, %c1_i32 : i32
    %c4_i32 = arith.constant 4 : i32
    %1 = arith.muli %0, %c4_i32 : i32
    %c0_i32 = arith.constant 0 : i32
    %c0_i32_0 = arith.constant 0 : i32
    %c0_i32_1 = arith.constant 0 : i32
    return %arg0, %1, %c0_i32, %c0_i32_0 : i32, i32, i32, i32
  }
  func.func @transform_2(%arg0: i32, %arg1: i32, %arg2: i32) -> (i32, i32) {
    %c0_i32 = arith.constant 0 : i32
    %c0_i32_0 = arith.constant 0 : i32
    return %c0_i32, %arg2 : i32, i32
  }
  func.func @transform_3(%arg0: i32, %arg1: i32, %arg2: i32) -> (i32, i32) {
    %c0_i32 = arith.constant 0 : i32
    %c0_i32_0 = arith.constant 0 : i32
    return %c0_i32, %arg2 : i32, i32
  }
  func.func @transform_4(%arg0: i32, %arg1: i32, %arg2: i32) -> (i32, i32, i32) {
    %c0_i32 = arith.constant 0 : i32
    return %arg0, %arg1, %arg2 : i32, i32, i32
  }
}

</mosaic_0001>

<llo_original>
// kernel: tpu_custom_call.1
$region0: #{tpu_custom_call.1}
  #allocation0 [shape = 'u32[]', space=smem, size = 0x4, offset = 0x4, fixed_abs, tag = 'smem constant byte address 0x4 - core index']
  #allocation1 [shape = 'u32[72,128]{1,0:T(1,128)}', space=vmem, size = 0x9000, scoped, tag = 'internal scratch']
  %s0 = inlined_call_operand.vmem [shape: f32[2,24,18,4], index: 0, kind: input, shape index: {}]
  %s1 = inlined_call_operand.vmem [shape: f32[2,24,18,4], index: 1, kind: input, shape index: {}]
  %s2 = inlined_call_operand.vmem [shape: f32[36,128], index: 2, kind: input, shape index: {}]
  %s3 = inlined_call_operand.vmem [shape: f32[1,128], index: 3, kind: input, shape index: {}]
  %s4 = inlined_call_operand.hbm [shape: f32[2,256,128], index: 4, kind: output, shape index: {}]
  %s5 = sld [smem:[#allocation0]]
  $region49: #{tpu_custom_call.1} parent=0
    _
  %s7 = ssub.s32 1, %s5
  %s8 = scalar_select 0, %s7, %s5
  $region1: #{tpu_custom_call.1} parent=0
    #allocation2 [shape = 'u8[131072]{0}', space=vmem, size = 0x20000, scoped, tag = 'output window, operand 0']
    #allocation3 [shape = 's32[2]{0}', space=sflag, size = 0x8, scoped, tag = 'scoped memory for tpu_custom_call.1']
    %9 = vsyncpa [#allocation3], 0
    %s10 = scalar_lea.sflag [#allocation3], 1
    %11 = vsyncpa %s10, 0
    loop: start=0, step=1, limit=6
    $region2: #{tpu_custom_call.1} parent=1 // loop_pre_header
      _
    $region3: #{tpu_custom_call.1} parent=1 // loop_header
      %s13 = sphi 0, %s17
      %p14 = scmp.ge.s32.totalorder %s13, 6
      %s20 = sphi 0, %s39
      %s21 = sphi 0, %s35
      %s22 = sphi 0, %s31
      %s23 = sphi 0, %s20
      %s24 = sphi 0, %s21
      %s25 = sphi 0, %s22
      %s26 = sphi 0, %s23
      %s27 = sphi 0, %s24
      %s28 = sphi 0, %s25
      %s44 = sphi 0, %s46
      %s47 = sphi 0, %s44
      %s48 = sphi 0, %s47
      %s64 = sphi 0, %s48
      %s76 = sphi 0, %s78
      %s79 = sphi 0, %s76
      %s80 = sphi 0, %s79
      %s96 = sphi 0, %s80
      %s102 = sphi 0, %s104
      %s105 = sphi 0, %s102
      %s106 = sphi 0, %s105
      %s122 = sphi 0, %s106
      %s128 = sphi 0, %s130
      %s131 = sphi 0, %s128
      %s132 = sphi 0, %s131
      %s148 = sphi 0, %s132
      %s158 = sphi 0, %s160
      %s161 = sphi 0, %s158
      %s162 = sphi 0, %s161
      %s178 = sphi 0, %s162
    $region4: #{tpu_custom_call.1} parent=1 // loop_header_branch
      %16 = sbr.rel (%p14) target = $region8
    $region5: #{tpu_custom_call.1} parent=1 // loop_body
      %s18 = ssub.s32 %s13, 1
      %s19 = ssub.s32 %s13, 2
      %s29 = sadd.s32 1, %s22
      %p30 = scmp.ge.s32.totalorder %s29, 1
      %s31 = scalar_select %p30, 0, %s29
      %s32 = sadd.s32 1, %s21
      %s33 = scalar_select %p30, %s32, %s21
      %p34 = scmp.ge.s32.totalorder %s33, 2
      %s35 = scalar_select %p34, 0, %s33
      %s36 = sadd.s32 1, %s20
      %s37 = scalar_select %p34, %s36, %s20
      %p38 = scmp.ge.s32.totalorder %s37, 2
      %s39 = scalar_select %p38, 0, %s37
      %s40 = ssub.s32 %s20, %s39
      %s41 = ssub.s32 %s21, %s35
      %s42 = sor.u32 %s40, %s41
      %p43 = scmp.eq.s32.totalorder %s42, 0
      %s45 = sadd.s32 %s44, 1
      %s46 = scalar_select %p43, %s44, %s45
      %p49 = pneg %p43
      %p50 = scmp.eq.s32.totalorder %s13, 3
      %p51 = por %p49, %p50
      %p52 = scmp.ne.s32.totalorder %s44, %s47
      %p53 = scmp.eq.s32.totalorder %s13, 0
      %p54 = por %p52, %p53
      %p55 = scmp.ne.s32.totalorder %s44, %s47
      %p56 = scmp.eq.s32.totalorder %s18, 3
      %p57 = por %p55, %p56
      %p58 = scmp.ne.s32.totalorder %s47, %s48
      %p59 = scmp.eq.s32.totalorder %s18, 0
      %p60 = por %p58, %p59
      %p61 = scmp.ne.s32.totalorder %s47, %s48
      %p62 = scmp.eq.s32.totalorder %s19, 3
      %p63 = por %p61, %p62
      %p65 = scmp.ne.s32.totalorder %s48, %s64
      %p66 = scmp.eq.s32.totalorder %s19, 0
      %p67 = por %p65, %p66
      %s68 = sadd.s32 %s21, 1
      %s69 = smul.u32 %s68, 4
      %s70 = sadd.s32 %s35, 1
      %s71 = smul.u32 %s70, 4
      %s72 = ssub.s32 %s20, %s39
      %s73 = ssub.s32 %s69, %s71
      %s74 = sor.u32 %s72, %s73
      %p75 = scmp.eq.s32.totalorder %s74, 0
      %s77 = sadd.s32 %s76, 1
      %s78 = scalar_select %p75, %s76, %s77
      %p81 = pneg %p75
      %p82 = scmp.eq.s32.totalorder %s13, 3
      %p83 = por %p81, %p82
      %p84 = scmp.ne.s32.totalorder %s76, %s79
      %p85 = scmp.eq.s32.totalorder %s13, 0
      %p86 = por %p84, %p85
      %p87 = scmp.ne.s32.totalorder %s76, %s79
      %p88 = scmp.eq.s32.totalorder %s18, 3
      %p89 = por %p87, %p88
      %p90 = scmp.ne.s32.totalorder %s79, %s80
      %p91 = scmp.eq.s32.totalorder %s18, 0
      %p92 = por %p90, %p91
      %p93 = scmp.ne.s32.totalorder %s79, %s80
      %p94 = scmp.eq.s32.totalorder %s19, 3
      %p95 = por %p93, %p94
      %p97 = scmp.ne.s32.totalorder %s80, %s96
      %p98 = scmp.eq.s32.totalorder %s19, 0
      %p99 = por %p97, %p98
      %s100 = ssub.s32 %s22, %s31
      %p101 = scmp.eq.s32.totalorder %s100, 0
      %s103 = sadd.s32 %s102, 1
      %s104 = scalar_select %p101, %s102, %s103
      %p107 = pneg %p101
      %p108 = scmp.eq.s32.totalorder %s13, 3
      %p109 = por %p107, %p108
      %p110 = scmp.ne.s32.totalorder %s102, %s105
      %p111 = scmp.eq.s32.totalorder %s13, 0
      %p112 = por %p110, %p111
      %p113 = scmp.ne.s32.totalorder %s102, %s105
      %p114 = scmp.eq.s32.totalorder %s18, 3
      %p115 = por %p113, %p114
      %p116 = scmp.ne.s32.totalorder %s105, %s106
      %p117 = scmp.eq.s32.totalorder %s18, 0
      %p118 = por %p116, %p117
      %p119 = scmp.ne.s32.totalorder %s105, %s106
      %p120 = scmp.eq.s32.totalorder %s19, 3
      %p121 = por %p119, %p120
      %p123 = scmp.ne.s32.totalorder %s106, %s122
      %p124 = scmp.eq.s32.totalorder %s19, 0
      %p125 = por %p123, %p124
      %s126 = ssub.s32 %s22, %s31
      %p127 = scmp.eq.s32.totalorder %s126, 0
      %s129 = sadd.s32 %s128, 1
      %s130 = scalar_select %p127, %s128, %s129
      %p133 = pneg %p127
      %p134 = scmp.eq.s32.totalorder %s13, 3
      %p135 = por %p133, %p134
      %p136 = scmp.ne.s32.totalorder %s128, %s131
      %p137 = scmp.eq.s32.totalorder %s13, 0
      %p138 = por %p136, %p137
      %p139 = scmp.ne.s32.totalorder %s128, %s131
      %p140 = scmp.eq.s32.totalorder %s18, 3
      %p141 = por %p139, %p140
      %p142 = scmp.ne.s32.totalorder %s131, %s132
      %p143 = scmp.eq.s32.totalorder %s18, 0
      %p144 = por %p142, %p143
      %p145 = scmp.ne.s32.totalorder %s131, %s132
      %p146 = scmp.eq.s32.totalorder %s19, 3
      %p147 = por %p145, %p146
      %p149 = scmp.ne.s32.totalorder %s132, %s148
      %p150 = scmp.eq.s32.totalorder %s19, 0
      %p151 = por %p149, %p150
      %s152 = ssub.s32 %s20, %s39
      %s153 = ssub.s32 %s21, %s35
      %s154 = sor.u32 %s152, %s153
      %s155 = ssub.s32 %s22, %s31
      %s156 = sor.u32 %s154, %s155
      %p157 = scmp.eq.s32.totalorder %s156, 0
      %s159 = sadd.s32 %s158, 1
      %s160 = scalar_select %p157, %s158, %s159
      %p163 = pneg %p157
      %p164 = scmp.eq.s32.totalorder %s13, 3
      %p165 = por %p163, %p164
      %p166 = scmp.ne.s32.totalorder %s158, %s161
      %p167 = scmp.eq.s32.totalorder %s13, 0
      %p168 = por %p166, %p167
      %p169 = scmp.ne.s32.totalorder %s158, %s161
      %p170 = scmp.eq.s32.totalorder %s18, 3
      %p171 = por %p169, %p170
      %p172 = scmp.ne.s32.totalorder %s161, %s162
      %p173 = scmp.eq.s32.totalorder %s18, 0
      %p174 = por %p172, %p173
      %p175 = scmp.ne.s32.totalorder %s161, %s162
      %p176 = scmp.eq.s32.totalorder %s19, 3
      %p177 = por %p175, %p176
      %p179 = scmp.ne.s32.totalorder %s162, %s178
      %p180 = scmp.eq.s32.totalorder %s19, 0
      %p181 = por %p179, %p180
      %p182 = scmp.le.s32.totalorder 1, %s13
      %p183 = scmp.lt.s32.totalorder %s13, 5
      %p184 = pnand %p182, %p183
      %p185 = pneg %p184
      // Predicated region
      $region9: #{tpu_custom_call.1} parent=5 // pred_check
        _
      $region10: #{tpu_custom_call.1} parent=5 // pred_check_branch
        %187 = sbr.rel (%p184) target = $region12
      $region11: #{tpu_custom_call.1} parent=5 // pred_region
        %s188 = ssub.s32 %s13, 1
        // Predicated region
        $region13: #{tpu_custom_call.1} parent=11 // pred_check
          %p189 = pneg %p118
        $region14: #{tpu_custom_call.1} parent=11 // pred_check_branch
          %191 = sbr.rel (%p189) target = $region16
        $region15: #{tpu_custom_call.1} parent=11 // pred_region
          %p192 = scmp.lt.s32.totalorder %s25, 0
          %s193 = scalar_select %p192, %s25, 0
          %s194 = smul.addr %s193, 8
          %s195 = scalar_lea.vmem %s2, %s194
        $region16: #{tpu_custom_call.1} parent=11 // pred_fallthru
          _
        // Predicated region
        $region17: #{tpu_custom_call.1} parent=11 // pred_check
          %p196 = pneg %p144
        $region18: #{tpu_custom_call.1} parent=11 // pred_check_branch
          %198 = sbr.rel (%p196) target = $region20
        $region19: #{tpu_custom_call.1} parent=11 // pred_region
          %p199 = scmp.lt.s32.totalorder %s25, 0
          %s200 = scalar_select %p199, %s25, 0
          %s201 = scalar_lea.vmem %s3, %s200
        $region20: #{tpu_custom_call.1} parent=11 // pred_fallthru
          _
      $region12: #{tpu_custom_call.1} parent=5 // pred_fallthru
        _
      %p202 = scmp.lt.s32.totalorder %s13, 4
      // Predicated region
      $region21: #{tpu_custom_call.1} parent=5 // pred_check
        %p203 = pneg %p202
      $region22: #{tpu_custom_call.1} parent=5 // pred_check_branch
        %205 = sbr.rel (%p203) target = $region24
      $region23: #{tpu_custom_call.1} parent=5 // pred_region
        // Predicated region
        $region25: #{tpu_custom_call.1} parent=23 // pred_check
          %p206 = pneg %p54
        $region26: #{tpu_custom_call.1} parent=23 // pred_check_branch
          %208 = sbr.rel (%p206) target = $region28
        $region27: #{tpu_custom_call.1} parent=23 // pred_region
          %s209 = smul.u32 8, %s21
          %p210 = scmp.lt.s32.totalorder %s20, 1
          %s211 = scalar_select %p210, %s20, 1
          %p212 = scmp.lt.s32.totalorder %s209, 23
          %s213 = scalar_select %p212, %s209, 23
          %s214 = smul.addr %s213, 3
          %s215 = smul.addr %s211, 72
          %s216 = sadd.s32 %s214, %s215
          %s217 = smul.addr %s216, 8
          %s218 = scalar_lea.vmem %s0, %s217
          %s219 = smul.u32 8, %s21
        $region28: #{tpu_custom_call.1} parent=23 // pred_fallthru
          _
        // Predicated region
        $region29: #{tpu_custom_call.1} parent=23 // pred_check
          %p220 = pneg %p86
        $region30: #{tpu_custom_call.1} parent=23 // pred_check_branch
          %222 = sbr.rel (%p220) target = $region32
        $region31: #{tpu_custom_call.1} parent=23 // pred_region
          %s223 = sadd.s32 %s21, 1
          %s224 = smul.u32 %s223, 4
          %s225 = smul.u32 2, %s224
          %p226 = scmp.lt.s32.totalorder %s20, 1
          %s227 = scalar_select %p226, %s20, 1
          %p228 = scmp.lt.s32.totalorder %s225, 23
          %s229 = scalar_select %p228, %s225, 23
          %s230 = smul.addr %s229, 3
          %s231 = smul.addr %s227, 72
          %s232 = sadd.s32 %s230, %s231
          %s233 = smul.addr %s232, 8
          %s234 = scalar_lea.vmem %s1, %s233
          %s235 = sadd.s32 %s21, 1
          %s236 = smul.u32 %s235, 4
          %s237 = smul.u32 2, %s236
        $region32: #{tpu_custom_call.1} parent=23 // pred_fallthru
          _
      $region24: #{tpu_custom_call.1} parent=5 // pred_fallthru
        _
      %p238 = scmp.le.s32.totalorder 1, %s13
      %p239 = scmp.lt.s32.totalorder %s13, 5
      %p240 = pnand %p238, %p239
      %p241 = pneg %p240
      // Predicated region
      $region33: #{tpu_custom_call.1} parent=5 // pred_check
        _
      $region34: #{tpu_custom_call.1} parent=5 // pred_check_branch
        %243 = sbr.rel (%p240) target = $region36
      $region35: #{tpu_custom_call.1} parent=5 // pred_region
        %s244 = ssub.s32 %s13, 1
        %s245 = smul.u32 8, %s24
        %p246 = scmp.lt.s32.totalorder %s23, 1
        %s247 = scalar_select %p246, %s23, 1
        %p248 = scmp.lt.s32.totalorder %s245, 23
        %s249 = scalar_select %p248, %s245, 23
        %s250 = smul.addr %s249, 3
        %s251 = smul.addr %s247, 72
        %s252 = sadd.s32 %s250, %s251
        %s253 = smul.addr %s252, 8
        %s254 = scalar_lea.vmem %s0, %s253
        %p255 = pneg %p60
        %p256 = pneg %p57
        %s257 = sadd.s32 %s24, 1
        %s258 = smul.u32 %s257, 4
        %s259 = smul.u32 2, %s258
        %p260 = scmp.lt.s32.totalorder %s23, 1
        %s261 = scalar_select %p260, %s23, 1
        %p262 = scmp.lt.s32.totalorder %s259, 23
        %s263 = scalar_select %p262, %s259, 23
        %s264 = smul.addr %s263, 3
        %s265 = smul.addr %s261, 72
        %s266 = sadd.s32 %s264, %s265
        %s267 = smul.addr %s266, 8
        %s268 = scalar_lea.vmem %s1, %s267
        %p269 = pneg %p92
        %p270 = pneg %p89
        %p271 = scmp.lt.s32.totalorder %s25, 0
        %s272 = scalar_select %p271, %s25, 0
        %s273 = smul.addr %s272, 8
        %s274 = scalar_lea.vmem %s2, %s273
        %p275 = pneg %p118
        %p276 = pneg %p115
        %p277 = scmp.lt.s32.totalorder %s25, 0
        %s278 = scalar_select %p277, %s25, 0
        %s279 = scalar_lea.vmem %s3, %s278
        %p280 = pneg %p144
        %p281 = pneg %p141
        %p282 = pneg %p174
        %p283 = pneg %p171
        %s284 = sand.u32 %s161, 1
        %s285 = scalar_lea.sflag [#allocation3], %s284
        %s286 = sand.u32 %s161, 1
        %s287 = smul.addr %s286, 128
        %s288 = scalar_lea.vmem [#allocation2], %s287
        %s289 = smul.u32 8, %s24
        %p290 = scmp.lt.s32.totalorder %s23, 1
        %s291 = scalar_select %p290, %s23, 1
        %p292 = scmp.lt.s32.totalorder %s289, 23
        %s293 = scalar_select %p292, %s289, 23
        %s294 = smul.addr %s293, 3
        %s295 = smul.addr %s291, 72
        %s296 = sadd.s32 %s294, %s295
        %s297 = smul.addr %s296, 8
        %s298 = scalar_lea.vmem %s0, %s297
        %s299 = smul.u32 8, %s24
        %s300 = sadd.s32 %s24, 1
        %s301 = smul.u32 %s300, 4
        %s302 = smul.u32 2, %s301
        %p303 = scmp.lt.s32.totalorder %s23, 1
        %s304 = scalar_select %p303, %s23, 1
        %p305 = scmp.lt.s32.totalorder %s302, 23
        %s306 = scalar_select %p305, %s302, 23
        %s307 = smul.addr %s306, 3
        %s308 = smul.addr %s304, 72
        %s309 = sadd.s32 %s307, %s308
        %s310 = smul.addr %s309, 8
        %s311 = scalar_lea.vmem %s1, %s310
        %s312 = sadd.s32 %s24, 1
        %s313 = smul.u32 %s312, 4
        %s314 = smul.u32 2, %s313
        %p315 = scmp.lt.s32.totalorder %s25, 0
        %s316 = scalar_select %p315, %s25, 0
        %s317 = smul.addr %s316, 8
        %s318 = scalar_lea.vmem %s2, %s317
        %p319 = scmp.lt.s32.totalorder %s25, 0
        %s320 = scalar_select %p319, %s25, 0
        %s321 = scalar_lea.vmem %s3, %s320
        %s322 = smul.u32 16, %s24
        %v323 = vld [vmem:[%s298] sm:$0xff]
        %v324 = vld [vmem:[%s298 + $0x8] sm:$0xff]
        %v325 = vld [vmem:[%s298 + $0x10] sm:$0x3]
        %v326 = vld [vmem:[%s298 + $0x18] sm:$0xff]
        %v327 = vld [vmem:[%s298 + $0x20] sm:$0xff]
        %v328 = vld [vmem:[%s298 + $0x28] sm:$0x3]
        %v329 = vld [vmem:[%s298 + $0x30] sm:$0xff]
        %v330 = vld [vmem:[%s298 + $0x38] sm:$0xff]
        %v331 = vld [vmem:[%s298 + $0x40] sm:$0x3]
        %v332 = vld [vmem:[%s298 + $0x48] sm:$0xff]
        %v333 = vld [vmem:[%s298 + $0x50] sm:$0xff]
        %v334 = vld [vmem:[%s298 + $0x58] sm:$0x3]
        %v335 = vld [vmem:[%s298 + $0x60] sm:$0xff]
        %v336 = vld [vmem:[%s298 + $0x68] sm:$0xff]
        %v337 = vld [vmem:[%s298 + $0x70] sm:$0x3]
        %v338 = vld [vmem:[%s298 + $0x78] sm:$0xff]
        %v339 = vld [vmem:[%s298 + $0x80] sm:$0xff]
        %v340 = vld [vmem:[%s298 + $0x88] sm:$0x3]
        %v341 = vld [vmem:[%s298 + $0x90] sm:$0xff]
        %v342 = vld [vmem:[%s298 + $0x98] sm:$0xff]
        %v343 = vld [vmem:[%s298 + $0xa0] sm:$0x3]
        %v344 = vld [vmem:[%s298 + $0xa8] sm:$0xff]
        %v345 = vld [vmem:[%s298 + $0xb0] sm:$0xff]
        %v346 = vld [vmem:[%s298 + $0xb8] sm:$0x3]
        %v347 = vld [vmem:[%s311] sm:$0xff]
        %v348 = vld [vmem:[%s311 + $0x8] sm:$0xff]
        %v349 = vld [vmem:[%s311 + $0x10] sm:$0x3]
        %v350 = vld [vmem:[%s311 + $0x18] sm:$0xff]
        %v351 = vld [vmem:[%s311 + $0x20] sm:$0xff]
        %v352 = vld [vmem:[%s311 + $0x28] sm:$0x3]
        %vm377 = vcmask 1046528
        %v378 = vrot.slane %v323, 1
        %v379 = vrot.slane %v324, 1
        %v380 = vsel %vm377, %v378, %v379
        %v381 = vrot.slane %v325, 1
        %v382 = vsel %vm377, %v379, %v381
        %v383 = vrot.slane %v326, 1
        %v384 = vrot.slane %v327, 1
        %v385 = vsel %vm377, %v383, %v384
        %v386 = vrot.slane %v328, 1
        %v387 = vsel %vm377, %v384, %v386
        %v388 = vrot.slane %v329, 1
        %v389 = vrot.slane %v330, 1
        %v390 = vsel %vm377, %v388, %v389
        %v391 = vrot.slane %v331, 1
        %v392 = vsel %vm377, %v389, %v391
        %v393 = vrot.slane %v332, 1
        %v394 = vrot.slane %v333, 1
        %v395 = vsel %vm377, %v393, %v394
        %v396 = vrot.slane %v334, 1
        %v397 = vsel %vm377, %v394, %v396
        %v398 = vrot.slane %v335, 1
        %v399 = vrot.slane %v336, 1
        %v400 = vsel %vm377, %v398, %v399
        %v401 = vrot.slane %v337, 1
        %v402 = vsel %vm377, %v399, %v401
        %v403 = vrot.slane %v338, 1
        %v404 = vrot.slane %v339, 1
        %v405 = vsel %vm377, %v403, %v404
        %v406 = vrot.slane %v340, 1
        %v407 = vsel %vm377, %v404, %v406
        %v408 = vrot.slane %v341, 1
        %v409 = vrot.slane %v342, 1
        %v410 = vsel %vm377, %v408, %v409
        %v411 = vrot.slane %v343, 1
        %v412 = vsel %vm377, %v409, %v411
        %v413 = vrot.slane %v344, 1
        %v414 = vrot.slane %v345, 1
        %v415 = vsel %vm377, %v413, %v414
        %v416 = vrot.slane %v346, 1
        %v417 = vsel %vm377, %v414, %v416
        %418 = vrot.lane.b32.xlu0 %v380, 4
        %v419 = vpop.permute.xlu0 %418
        %420 = vrot.lane.b32.xlu0 %v382, 4
        %v421 = vpop.permute.xlu0 %420
        %422 = vrot.lane.b32.xlu0 %v385, 4
        %v423 = vpop.permute.xlu0 %422
        %424 = vrot.lane.b32.xlu0 %v387, 4
        %v425 = vpop.permute.xlu0 %424
        %426 = vrot.lane.b32.xlu0 %v390, 4
        %v427 = vpop.permute.xlu0 %426
        %428 = vrot.lane.b32.xlu0 %v392, 4
        %v429 = vpop.permute.xlu0 %428
        %430 = vrot.lane.b32.xlu0 %v395, 4
        %v431 = vpop.permute.xlu0 %430
        %432 = vrot.lane.b32.xlu0 %v397, 4
        %v433 = vpop.permute.xlu0 %432
        %434 = vrot.lane.b32.xlu0 %v400, 4
        %v435 = vpop.permute.xlu0 %434
        %436 = vrot.lane.b32.xlu0 %v402, 4
        %v437 = vpop.permute.xlu0 %436
        %438 = vrot.lane.b32.xlu0 %v405, 4
        %v439 = vpop.permute.xlu0 %438
        %440 = vrot.lane.b32.xlu0 %v407, 4
        %v441 = vpop.permute.xlu0 %440
        %442 = vrot.lane.b32.xlu0 %v410, 4
        %v443 = vpop.permute.xlu0 %442
        %444 = vrot.lane.b32.xlu0 %v412, 4
        %v445 = vpop.permute.xlu0 %444
        %446 = vrot.lane.b32.xlu0 %v415, 4
        %v447 = vpop.permute.xlu0 %446
        %448 = vrot.lane.b32.xlu0 %v417, 4
        %v449 = vpop.permute.xlu0 %448
        %vm466 = vcmask 1045504
        %v467 = vrot.slane %v323, 2
        %v468 = vrot.slane %v324, 2
        %v469 = vsel %vm466, %v467, %v468
        %v470 = vrot.slane %v325, 2
        %v471 = vsel %vm466, %v468, %v470
        %v472 = vrot.slane %v326, 2
        %v473 = vrot.slane %v327, 2
        %v474 = vsel %vm466, %v472, %v473
        %v475 = vrot.slane %v328, 2
        %v476 = vsel %vm466, %v473, %v475
        %v477 = vrot.slane %v329, 2
        %v478 = vrot.slane %v330, 2
        %v479 = vsel %vm466, %v477, %v478
        %v480 = vrot.slane %v331, 2
        %v481 = vsel %vm466, %v478, %v480
        %v482 = vrot.slane %v332, 2
        %v483 = vrot.slane %v333, 2
        %v484 = vsel %vm466, %v482, %v483
        %v485 = vrot.slane %v334, 2
        %v486 = vsel %vm466, %v483, %v485
        %v487 = vrot.slane %v335, 2
        %v488 = vrot.slane %v336, 2
        %v489 = vsel %vm466, %v487, %v488
        %v490 = vrot.slane %v337, 2
        %v491 = vsel %vm466, %v488, %v490
        %v492 = vrot.slane %v338, 2
        %v493 = vrot.slane %v339, 2
        %v494 = vsel %vm466, %v492, %v493
        %v495 = vrot.slane %v340, 2
        %v496 = vsel %vm466, %v493, %v495
        %v497 = vrot.slane %v341, 2
        %v498 = vrot.slane %v342, 2
        %v499 = vsel %vm466, %v497, %v498
        %v500 = vrot.slane %v343, 2
        %v501 = vsel %vm466, %v498, %v500
        %v502 = vrot.slane %v344, 2
        %v503 = vrot.slane %v345, 2
        %v504 = vsel %vm466, %v502, %v503
        %v505 = vrot.slane %v346, 2
        %v506 = vsel %vm466, %v503, %v505
        %507 = vrot.lane.b32.xlu0 %v469, 8
        %v508 = vpop.permute.xlu0 %507
        %509 = vrot.lane.b32.xlu0 %v471, 8
        %v510 = vpop.permute.xlu0 %509
        %511 = vrot.lane.b32.xlu0 %v474, 8
        %v512 = vpop.permute.xlu0 %511
        %513 = vrot.lane.b32.xlu0 %v476, 8
        %v514 = vpop.permute.xlu0 %513
        %515 = vrot.lane.b32.xlu0 %v479, 8
        %v516 = vpop.permute.xlu0 %515
        %517 = vrot.lane.b32.xlu0 %v481, 8
        %v518 = vpop.permute.xlu0 %517
        %519 = vrot.lane.b32.xlu0 %v484, 8
        %v520 = vpop.permute.xlu0 %519
        %521 = vrot.lane.b32.xlu0 %v486, 8
        %v522 = vpop.permute.xlu0 %521
        %523 = vrot.lane.b32.xlu0 %v489, 8
        %v524 = vpop.permute.xlu0 %523
        %525 = vrot.lane.b32.xlu0 %v491, 8
        %v526 = vpop.permute.xlu0 %525
        %527 = vrot.lane.b32.xlu0 %v494, 8
        %v528 = vpop.permute.xlu0 %527
        %529 = vrot.lane.b32.xlu0 %v496, 8
        %v530 = vpop.permute.xlu0 %529
        %531 = vrot.lane.b32.xlu0 %v499, 8
        %v532 = vpop.permute.xlu0 %531
        %533 = vrot.lane.b32.xlu0 %v501, 8
        %v534 = vpop.permute.xlu0 %533
        %535 = vrot.lane.b32.xlu0 %v504, 8
        %v536 = vpop.permute.xlu0 %535
        %537 = vrot.lane.b32.xlu0 %v506, 8
        %v538 = vpop.permute.xlu0 %537
        %557 = vrot.lane.b32.xlu0 %v326, 12
        %v558 = vpop.permute.xlu0 %557
        %559 = vrot.lane.b32.xlu0 %v327, 12
        %v560 = vpop.permute.xlu0 %559
        %561 = vrot.lane.b32.xlu0 %v329, 12
        %v562 = vpop.permute.xlu0 %561
        %563 = vrot.lane.b32.xlu0 %v330, 12
        %v564 = vpop.permute.xlu0 %563
        %565 = vrot.lane.b32.xlu0 %v332, 12
        %v566 = vpop.permute.xlu0 %565
        %567 = vrot.lane.b32.xlu0 %v333, 12
        %v568 = vpop.permute.xlu0 %567
        %569 = vrot.lane.b32.xlu0 %v335, 12
        %v570 = vpop.permute.xlu0 %569
        %571 = vrot.lane.b32.xlu0 %v336, 12
        %v572 = vpop.permute.xlu0 %571
        %573 = vrot.lane.b32.xlu0 %v338, 12
        %v574 = vpop.permute.xlu0 %573
        %575 = vrot.lane.b32.xlu0 %v339, 12
        %v576 = vpop.permute.xlu0 %575
        %577 = vrot.lane.b32.xlu0 %v341, 12
        %v578 = vpop.permute.xlu0 %577
        %579 = vrot.lane.b32.xlu0 %v342, 12
        %v580 = vpop.permute.xlu0 %579
        %581 = vrot.lane.b32.xlu0 %v344, 12
        %v582 = vpop.permute.xlu0 %581
        %583 = vrot.lane.b32.xlu0 %v345, 12
        %v584 = vpop.permute.xlu0 %583
        %585 = vrot.lane.b32.xlu0 %v347, 12
        %v586 = vpop.permute.xlu0 %585
        %587 = vrot.lane.b32.xlu0 %v348, 12
        %v588 = vpop.permute.xlu0 %587
        %v606 = vrot.slane %v347, 1
        %v607 = vrot.slane %v348, 1
        %v608 = vsel %vm377, %v606, %v607
        %v609 = vrot.slane %v349, 1
        %v610 = vsel %vm377, %v607, %v609
        %611 = vrot.lane.b32.xlu0 %v385, 16
        %v612 = vpop.permute.xlu0 %611
        %613 = vrot.lane.b32.xlu0 %v387, 16
        %v614 = vpop.permute.xlu0 %613
        %615 = vrot.lane.b32.xlu0 %v390, 16
        %v616 = vpop.permute.xlu0 %615
        %617 = vrot.lane.b32.xlu0 %v392, 16
        %v618 = vpop.permute.xlu0 %617
        %619 = vrot.lane.b32.xlu0 %v395, 16
        %v620 = vpop.permute.xlu0 %619
        %621 = vrot.lane.b32.xlu0 %v397, 16
        %v622 = vpop.permute.xlu0 %621
        %623 = vrot.lane.b32.xlu0 %v400, 16
        %v624 = vpop.permute.xlu0 %623
        %625 = vrot.lane.b32.xlu0 %v402, 16
        %v626 = vpop.permute.xlu0 %625
        %627 = vrot.lane.b32.xlu0 %v405, 16
        %v628 = vpop.permute.xlu0 %627
        %629 = vrot.lane.b32.xlu0 %v407, 16
        %v630 = vpop.permute.xlu0 %629
        %631 = vrot.lane.b32.xlu0 %v410, 16
        %v632 = vpop.permute.xlu0 %631
        %633 = vrot.lane.b32.xlu0 %v412, 16
        %v634 = vpop.permute.xlu0 %633
        %635 = vrot.lane.b32.xlu0 %v415, 16
        %v636 = vpop.permute.xlu0 %635
        %637 = vrot.lane.b32.xlu0 %v417, 16
        %v638 = vpop.permute.xlu0 %637
        %639 = vrot.lane.b32.xlu0 %v608, 16
        %v640 = vpop.permute.xlu0 %639
        %641 = vrot.lane.b32.xlu0 %v610, 16
        %v642 = vpop.permute.xlu0 %641
        %v659 = vrot.slane %v347, 2
        %v660 = vrot.slane %v348, 2
        %v661 = vsel %vm466, %v659, %v660
        %v662 = vrot.slane %v349, 2
        %v663 = vsel %vm466, %v660, %v662
        %664 = vrot.lane.b32.xlu0 %v474, 20
        %v665 = vpop.permute.xlu0 %664
        %666 = vrot.lane.b32.xlu0 %v476, 20
        %v667 = vpop.permute.xlu0 %666
        %668 = vrot.lane.b32.xlu0 %v479, 20
        %v669 = vpop.permute.xlu0 %668
        %670 = vrot.lane.b32.xlu0 %v481, 20
        %v671 = vpop.permute.xlu0 %670
        %672 = vrot.lane.b32.xlu0 %v484, 20
        %v673 = vpop.permute.xlu0 %672
        %674 = vrot.lane.b32.xlu0 %v486, 20
        %v675 = vpop.permute.xlu0 %674
        %676 = vrot.lane.b32.xlu0 %v489, 20
        %v677 = vpop.permute.xlu0 %676
        %678 = vrot.lane.b32.xlu0 %v491, 20
        %v679 = vpop.permute.xlu0 %678
        %680 = vrot.lane.b32.xlu0 %v494, 20
        %v681 = vpop.permute.xlu0 %680
        %682 = vrot.lane.b32.xlu0 %v496, 20
        %v683 = vpop.permute.xlu0 %682
        %684 = vrot.lane.b32.xlu0 %v499, 20
        %v685 = vpop.permute.xlu0 %684
        %686 = vrot.lane.b32.xlu0 %v501, 20
        %v687 = vpop.permute.xlu0 %686
        %688 = vrot.lane.b32.xlu0 %v504, 20
        %v689 = vpop.permute.xlu0 %688
        %690 = vrot.lane.b32.xlu0 %v506, 20
        %v691 = vpop.permute.xlu0 %690
        %692 = vrot.lane.b32.xlu0 %v661, 20
        %v693 = vpop.permute.xlu0 %692
        %694 = vrot.lane.b32.xlu0 %v663, 20
        %v695 = vpop.permute.xlu0 %694
        %714 = vrot.lane.b32.xlu0 %v329, 24
        %v715 = vpop.permute.xlu0 %714
        %716 = vrot.lane.b32.xlu0 %v330, 24
        %v717 = vpop.permute.xlu0 %716
        %718 = vrot.lane.b32.xlu0 %v332, 24
        %v719 = vpop.permute.xlu0 %718
        %720 = vrot.lane.b32.xlu0 %v333, 24
        %v721 = vpop.permute.xlu0 %720
        %722 = vrot.lane.b32.xlu0 %v335, 24
        %v723 = vpop.permute.xlu0 %722
        %724 = vrot.lane.b32.xlu0 %v336, 24
        %v725 = vpop.permute.xlu0 %724
        %726 = vrot.lane.b32.xlu0 %v338, 24
        %v727 = vpop.permute.xlu0 %726
        %728 = vrot.lane.b32.xlu0 %v339, 24
        %v729 = vpop.permute.xlu0 %728
        %730 = vrot.lane.b32.xlu0 %v341, 24
        %v731 = vpop.permute.xlu0 %730
        %732 = vrot.lane.b32.xlu0 %v342, 24
        %v733 = vpop.permute.xlu0 %732
        %734 = vrot.lane.b32.xlu0 %v344, 24
        %v735 = vpop.permute.xlu0 %734
        %736 = vrot.lane.b32.xlu0 %v345, 24
        %v737 = vpop.permute.xlu0 %736
        %738 = vrot.lane.b32.xlu0 %v347, 24
        %v739 = vpop.permute.xlu0 %738
        %740 = vrot.lane.b32.xlu0 %v348, 24
        %v741 = vpop.permute.xlu0 %740
        %742 = vrot.lane.b32.xlu0 %v350, 24
        %v743 = vpop.permute.xlu0 %742
        %744 = vrot.lane.b32.xlu0 %v351, 24
        %v745 = vpop.permute.xlu0 %744
        %v763 = vrot.slane %v350, 1
        %v764 = vrot.slane %v351, 1
        %v765 = vsel %vm377, %v763, %v764
        %v766 = vrot.slane %v352, 1
        %v767 = vsel %vm377, %v764, %v766
        %768 = vrot.lane.b32.xlu0 %v390, 28
        %v769 = vpop.permute.xlu0 %768
        %770 = vrot.lane.b32.xlu0 %v392, 28
        %v771 = vpop.permute.xlu0 %770
        %772 = vrot.lane.b32.xlu0 %v395, 28
        %v773 = vpop.permute.xlu0 %772
        %774 = vrot.lane.b32.xlu0 %v397, 28
        %v775 = vpop.permute.xlu0 %774
        %776 = vrot.lane.b32.xlu0 %v400, 28
        %v777 = vpop.permute.xlu0 %776
        %778 = vrot.lane.b32.xlu0 %v402, 28
        %v779 = vpop.permute.xlu0 %778
        %780 = vrot.lane.b32.xlu0 %v405, 28
        %v781 = vpop.permute.xlu0 %780
        %782 = vrot.lane.b32.xlu0 %v407, 28
        %v783 = vpop.permute.xlu0 %782
        %784 = vrot.lane.b32.xlu0 %v410, 28
        %v785 = vpop.permute.xlu0 %784
        %786 = vrot.lane.b32.xlu0 %v412, 28
        %v787 = vpop.permute.xlu0 %786
        %788 = vrot.lane.b32.xlu0 %v415, 28
        %v789 = vpop.permute.xlu0 %788
        %790 = vrot.lane.b32.xlu0 %v417, 28
        %v791 = vpop.permute.xlu0 %790
        %792 = vrot.lane.b32.xlu0 %v608, 28
        %v793 = vpop.permute.xlu0 %792
        %794 = vrot.lane.b32.xlu0 %v610, 28
        %v795 = vpop.permute.xlu0 %794
        %796 = vrot.lane.b32.xlu0 %v765, 28
        %v797 = vpop.permute.xlu0 %796
        %798 = vrot.lane.b32.xlu0 %v767, 28
        %v799 = vpop.permute.xlu0 %798
        %v816 = vrot.slane %v350, 2
        %v817 = vrot.slane %v351, 2
        %v818 = vsel %vm466, %v816, %v817
        %v819 = vrot.slane %v352, 2
        %v820 = vsel %vm466, %v817, %v819
        %821 = vrot.lane.b32.xlu0 %v479, 32
        %v822 = vpop.permute.xlu0 %821
        %823 = vrot.lane.b32.xlu0 %v481, 32
        %v824 = vpop.permute.xlu0 %823
        %825 = vrot.lane.b32.xlu0 %v484, 32
        %v826 = vpop.permute.xlu0 %825
        %827 = vrot.lane.b32.xlu0 %v486, 32
        %v828 = vpop.permute.xlu0 %827
        %829 = vrot.lane.b32.xlu0 %v489, 32
        %v830 = vpop.permute.xlu0 %829
        %831 = vrot.lane.b32.xlu0 %v491, 32
        %v832 = vpop.permute.xlu0 %831
        %833 = vrot.lane.b32.xlu0 %v494, 32
        %v834 = vpop.permute.xlu0 %833
        %835 = vrot.lane.b32.xlu0 %v496, 32
        %v836 = vpop.permute.xlu0 %835
        %837 = vrot.lane.b32.xlu0 %v499, 32
        %v838 = vpop.permute.xlu0 %837
        %839 = vrot.lane.b32.xlu0 %v501, 32
        %v840 = vpop.permute.xlu0 %839
        %841 = vrot.lane.b32.xlu0 %v504, 32
        %v842 = vpop.permute.xlu0 %841
        %843 = vrot.lane.b32.xlu0 %v506, 32
        %v844 = vpop.permute.xlu0 %843
        %845 = vrot.lane.b32.xlu0 %v661, 32
        %v846 = vpop.permute.xlu0 %845
        %847 = vrot.lane.b32.xlu0 %v663, 32
        %v848 = vpop.permute.xlu0 %847
        %849 = vrot.lane.b32.xlu0 %v818, 32
        %v850 = vpop.permute.xlu0 %849
        %851 = vrot.lane.b32.xlu0 %v820, 32
        %v852 = vpop.permute.xlu0 %851
        %vm869 = vcmask 31744
        %v870 = vsel %vm869, %v323, %v419
        %v871 = vsel %vm869, %v324, %v421
        %v872 = vsel %vm869, %v326, %v423
        %v873 = vsel %vm869, %v327, %v425
        %v874 = vsel %vm869, %v329, %v427
        %v875 = vsel %vm869, %v330, %v429
        %v876 = vsel %vm869, %v332, %v431
        %v877 = vsel %vm869, %v333, %v433
        %v878 = vsel %vm869, %v335, %v435
        %v879 = vsel %vm869, %v336, %v437
        %v880 = vsel %vm869, %v338, %v439
        %v881 = vsel %vm869, %v339, %v441
        %v882 = vsel %vm869, %v341, %v443
        %v883 = vsel %vm869, %v342, %v445
        %v884 = vsel %vm869, %v344, %v447
        %v885 = vsel %vm869, %v345, %v449
        %vm886 = vcmask 64512
        %v887 = vsel %vm886, %v870, %v508
        %v888 = vsel %vm886, %v871, %v510
        %v889 = vsel %vm886, %v872, %v512
        %v890 = vsel %vm886, %v873, %v514
        %v891 = vsel %vm886, %v874, %v516
        %v892 = vsel %vm886, %v875, %v518
        %v893 = vsel %vm886, %v876, %v520
        %v894 = vsel %vm886, %v877, %v522
        %v895 = vsel %vm886, %v878, %v524
        %v896 = vsel %vm886, %v879, %v526
        %v897 = vsel %vm886, %v880, %v528
        %v898 = vsel %vm886, %v881, %v530
        %v899 = vsel %vm886, %v882, %v532
        %v900 = vsel %vm886, %v883, %v534
        %v901 = vsel %vm886, %v884, %v536
        %v902 = vsel %vm886, %v885, %v538
        %vm903 = vcmask 97280
        %v904 = vsel %vm903, %v887, %v558
        %v905 = vsel %vm903, %v888, %v560
        %v906 = vsel %vm903, %v889, %v562
        %v907 = vsel %vm903, %v890, %v564
        %v908 = vsel %vm903, %v891, %v566
        %v909 = vsel %vm903, %v892, %v568
        %v910 = vsel %vm903, %v893, %v570
        %v911 = vsel %vm903, %v894, %v572
        %v912 = vsel %vm903, %v895, %v574
        %v913 = vsel %vm903, %v896, %v576
        %v914 = vsel %vm903, %v897, %v578
        %v915 = vsel %vm903, %v898, %v580
        %v916 = vsel %vm903, %v899, %v582
        %v917 = vsel %vm903, %v900, %v584
        %v918 = vsel %vm903, %v901, %v586
        %v919 = vsel %vm903, %v902, %v588
        %vm920 = vcmask 130048
        %v921 = vsel %vm920, %v904, %v612
        %v922 = vsel %vm920, %v905, %v614
        %v923 = vsel %vm920, %v906, %v616
        %v924 = vsel %vm920, %v907, %v618
        %v925 = vsel %vm920, %v908, %v620
        %v926 = vsel %vm920, %v909, %v622
        %v927 = vsel %vm920, %v910, %v624
        %v928 = vsel %vm920, %v911, %v626
        %v929 = vsel %vm920, %v912, %v628
        %v930 = vsel %vm920, %v913, %v630
        %v931 = vsel %vm920, %v914, %v632
        %v932 = vsel %vm920, %v915, %v634
        %v933 = vsel %vm920, %v916, %v636
        %v934 = vsel %vm920, %v917, %v638
        %v935 = vsel %vm920, %v918, %v640
        %v936 = vsel %vm920, %v919, %v642
        %vm937 = vcmask 162816
        %v938 = vsel %vm937, %v921, %v665
        %v939 = vsel %vm937, %v922, %v667
        %v940 = vsel %vm937, %v923, %v669
        %v941 = vsel %vm937, %v924, %v671
        %v942 = vsel %vm937, %v925, %v673
        %v943 = vsel %vm937, %v926, %v675
        %v944 = vsel %vm937, %v927, %v677
        %v945 = vsel %vm937, %v928, %v679
        %v946 = vsel %vm937, %v929, %v681
        %v947 = vsel %vm937, %v930, %v683
        %v948 = vsel %vm937, %v931, %v685
        %v949 = vsel %vm937, %v932, %v687
        %v950 = vsel %vm937, %v933, %v689
        %v951 = vsel %vm937, %v934, %v691
        %v952 = vsel %vm937, %v935, %v693
        %v953 = vsel %vm937, %v936, %v695
        %vm954 = vcmask 195584
        %v955 = vsel %vm954, %v938, %v715
        %v956 = vsel %vm954, %v939, %v717
        %v957 = vsel %vm954, %v940, %v719
        %v958 = vsel %vm954, %v941, %v721
        %v959 = vsel %vm954, %v942, %v723
        %v960 = vsel %vm954, %v943, %v725
        %v961 = vsel %vm954, %v944, %v727
        %v962 = vsel %vm954, %v945, %v729
        %v963 = vsel %vm954, %v946, %v731
        %v964 = vsel %vm954, %v947, %v733
        %v965 = vsel %vm954, %v948, %v735
        %v966 = vsel %vm954, %v949, %v737
        %v967 = vsel %vm954, %v950, %v739
        %v968 = vsel %vm954, %v951, %v741
        %v969 = vsel %vm954, %v952, %v743
        %v970 = vsel %vm954, %v953, %v745
        %vm971 = vcmask 228352
        %v972 = vsel %vm971, %v955, %v769
        %v973 = vsel %vm971, %v956, %v771
        %v974 = vsel %vm971, %v957, %v773
        %v975 = vsel %vm971, %v958, %v775
        %v976 = vsel %vm971, %v959, %v777
        %v977 = vsel %vm971, %v960, %v779
        %v978 = vsel %vm971, %v961, %v781
        %v979 = vsel %vm971, %v962, %v783
        %v980 = vsel %vm971, %v963, %v785
        %v981 = vsel %vm971, %v964, %v787
        %v982 = vsel %vm971, %v965, %v789
        %v983 = vsel %vm971, %v966, %v791
        %v984 = vsel %vm971, %v967, %v793
        %v985 = vsel %vm971, %v968, %v795
        %v986 = vsel %vm971, %v969, %v797
        %v987 = vsel %vm971, %v970, %v799
        %vm988 = vcmask 261120
        %v989 = vsel %vm988, %v972, %v822
        %v990 = vsel %vm988, %v973, %v824
        %v991 = vsel %vm988, %v974, %v826
        %v992 = vsel %vm988, %v975, %v828
        %v993 = vsel %vm988, %v976, %v830
        %v994 = vsel %vm988, %v977, %v832
        %v995 = vsel %vm988, %v978, %v834
        %v996 = vsel %vm988, %v979, %v836
        %v997 = vsel %vm988, %v980, %v838
        %v998 = vsel %vm988, %v981, %v840
        %v999 = vsel %vm988, %v982, %v842
        %v1000 = vsel %vm988, %v983, %v844
        %v1001 = vsel %vm988, %v984, %v846
        %v1002 = vsel %vm988, %v985, %v848
        %v1003 = vsel %vm988, %v986, %v850
        %v1004 = vsel %vm988, %v987, %v852
        %v1005 = vld [vmem:[%s318] sm:$0xff]
        %v1006 = vld [vmem:[%s318 + $0x8] sm:$0xff]
        %v1007 = vld [vmem:[%s318 + $0x10] sm:$0xff]
        %v1008 = vld [vmem:[%s318 + $0x18] sm:$0xff]
        %v1009 = vld [vmem:[%s318 + $0x20] sm:$0xf]
        %v1010 = vld [vmem:[%s321] sm:$0x1]
        %v1012 = vperm.slane %v1010, 0
        %vm1014 = vcmask 293888
        %v1016 = vsel %vm1014, %v989, 0
        %v1019 = vsel %vm1014, %v990, 0
        %v1022 = vsel %vm1014, %v991, 0
        %v1025 = vsel %vm1014, %v992, 0
        %v1028 = vsel %vm1014, %v993, 0
        %v1031 = vsel %vm1014, %v994, 0
        %v1034 = vsel %vm1014, %v995, 0
        %v1037 = vsel %vm1014, %v996, 0
        %v1040 = vsel %vm1014, %v997, 0
        %v1043 = vsel %vm1014, %v998, 0
        %v1046 = vsel %vm1014, %v999, 0
        %v1049 = vsel %vm1014, %v1000, 0
        %v1052 = vsel %vm1014, %v1001, 0
        %v1055 = vsel %vm1014, %v1002, 0
        %v1058 = vsel %vm1014, %v1003, 0
        %v1061 = vsel %vm1014, %v1004, 0
        %vm1063 = vcmask 1043456
        %v1065 = vsel %vm1063, %v1009, 0
        %1067 = vmatpush.msra.mxu0 0.0
        %1068 = vmatpush.msra.mxu0 0.0
        %1069 = vmatpush.msra.mxu0 0.0
        %1070 = vmatpush.msra.mxu0 0.0
        %1071 = vmatpush.msra.mxu0 0.0
        %1072 = vmatpush.msra.mxu0 0.0
        %1073 = vmatpush.msra.mxu0 0.0
        %1074 = vmatpush.msra.mxu0 0.0
        %1075 = vmatpush.msra.mxu0 0.0
        %1076 = vmatpush.msra.mxu0 0.0
        %1077 = vmatpush.msra.mxu0 0.0
        %1078 = vmatpush.msra.mxu0 %v1065
        %1079 = vmatpush.msra.mxu0 %v1008
        %1080 = vmatpush.msra.mxu0 %v1007
        %1081 = vmatpush.msra.mxu0 %v1006
        %1082 = vmatpush.msra.mxu0 %v1005
        %1083 = vmatmul.f32.gmra.mxu0 %v1016
        %v1084 = vpop.f32.mrf.mxu0
        %v1085 = vadd.f32 %v1012, %v1084
        %1086 = vmatmul.f32.gmra.mxu0 %v1019
        %v1087 = vpop.f32.mrf.mxu0
        %v1088 = vadd.f32 %v1012, %v1087
        %1089 = vmatmul.f32.gmra.mxu0 %v1022
        %v1090 = vpop.f32.mrf.mxu0
        %v1091 = vadd.f32 %v1012, %v1090
        %1092 = vmatmul.f32.gmra.mxu0 %v1025
        %v1093 = vpop.f32.mrf.mxu0
        %v1094 = vadd.f32 %v1012, %v1093
        %1095 = vmatmul.f32.gmra.mxu0 %v1028
        %v1096 = vpop.f32.mrf.mxu0
        %v1097 = vadd.f32 %v1012, %v1096
        %1098 = vmatmul.f32.gmra.mxu0 %v1031
        %v1099 = vpop.f32.mrf.mxu0
        %v1100 = vadd.f32 %v1012, %v1099
        %1101 = vmatmul.f32.gmra.mxu0 %v1034
        %v1102 = vpop.f32.mrf.mxu0
        %v1103 = vadd.f32 %v1012, %v1102
        %1104 = vmatmul.f32.gmra.mxu0 %v1037
        %v1105 = vpop.f32.mrf.mxu0
        %v1106 = vadd.f32 %v1012, %v1105
        %1107 = vmatmul.f32.gmra.mxu0 %v1040
        %v1108 = vpop.f32.mrf.mxu0
        %v1109 = vadd.f32 %v1012, %v1108
        %1110 = vmatmul.f32.gmra.mxu0 %v1043
        %v1111 = vpop.f32.mrf.mxu0
        %v1112 = vadd.f32 %v1012, %v1111
        %1113 = vmatmul.f32.gmra.mxu0 %v1046
        %v1114 = vpop.f32.mrf.mxu0
        %v1115 = vadd.f32 %v1012, %v1114
        %1116 = vmatmul.f32.gmra.mxu0 %v1049
        %v1117 = vpop.f32.mrf.mxu0
        %v1118 = vadd.f32 %v1012, %v1117
        %1119 = vmatmul.f32.gmra.mxu0 %v1052
        %v1120 = vpop.f32.mrf.mxu0
        %v1121 = vadd.f32 %v1012, %v1120
        %1122 = vmatmul.f32.gmra.mxu0 %v1055
        %v1123 = vpop.f32.mrf.mxu0
        %v1124 = vadd.f32 %v1012, %v1123
        %1125 = vmatmul.f32.gmra.mxu0 %v1058
        %v1126 = vpop.f32.mrf.mxu0
        %v1127 = vadd.f32 %v1012, %v1126
        %1128 = vmatmul.f32.gmra.mxu0 %v1061
        %v1129 = vpop.f32.mrf.mxu0
        %v1130 = vadd.f32 %v1012, %v1129
        %1131 = vdwg.mxu0
        %v1132 = vmax.f32 %v1085, 0.0
        %v1133 = vmax.f32 %v1088, 0.0
        %v1134 = vmax.f32 %v1091, 0.0
        %v1135 = vmax.f32 %v1094, 0.0
        %v1136 = vmax.f32 %v1097, 0.0
        %v1137 = vmax.f32 %v1100, 0.0
        %v1138 = vmax.f32 %v1103, 0.0
        %v1139 = vmax.f32 %v1106, 0.0
        %v1140 = vmax.f32 %v1109, 0.0
        %v1141 = vmax.f32 %v1112, 0.0
        %v1142 = vmax.f32 %v1115, 0.0
        %v1143 = vmax.f32 %v1118, 0.0
        %v1144 = vmax.f32 %v1121, 0.0
        %v1145 = vmax.f32 %v1124, 0.0
        %v1146 = vmax.f32 %v1127, 0.0
        %v1147 = vmax.f32 %v1130, 0.0
        %1148 = vst [vmem:[%s288] sm:$0xff] %v1132
        %1149 = vst [vmem:[%s288 + $0x8] sm:$0xff] %v1133
        %1150 = vst [vmem:[%s288 + $0x10] sm:$0xff] %v1134
        %1151 = vst [vmem:[%s288 + $0x18] sm:$0xff] %v1135
        %1152 = vst [vmem:[%s288 + $0x20] sm:$0xff] %v1136
        %1153 = vst [vmem:[%s288 + $0x28] sm:$0xff] %v1137
        %1154 = vst [vmem:[%s288 + $0x30] sm:$0xff] %v1138
        %1155 = vst [vmem:[%s288 + $0x38] sm:$0xff] %v1139
        %1156 = vst [vmem:[%s288 + $0x40] sm:$0xff] %v1140
        %1157 = vst [vmem:[%s288 + $0x48] sm:$0xff] %v1141
        %1158 = vst [vmem:[%s288 + $0x50] sm:$0xff] %v1142
        %1159 = vst [vmem:[%s288 + $0x58] sm:$0xff] %v1143
        %1160 = vst [vmem:[%s288 + $0x60] sm:$0xff] %v1144
        %1161 = vst [vmem:[%s288 + $0x68] sm:$0xff] %v1145
        %1162 = vst [vmem:[%s288 + $0x70] sm:$0xff] %v1146
        %1163 = vst [vmem:[%s288 + $0x78] sm:$0xff] %v1147
        %s1164 = sand.u32 %s161, 1
        %s1165 = scalar_lea.sflag [#allocation3], %s1164
        %s1166 = sand.u32 %s161, 1
        %s1167 = smul.addr %s1166, 128
        %s1168 = scalar_lea.vmem [#allocation2], %s1167
        // Predicated region
        $region37: #{tpu_custom_call.1} parent=35 // pred_check
          %p1169 = pneg %p171
        $region38: #{tpu_custom_call.1} parent=35 // pred_check_branch
          %1171 = sbr.rel (%p1169) target = $region40
        $region39: #{tpu_custom_call.1} parent=35 // pred_region
          %s1172 = smul.u32 16, %s24
          %1174 = vsyncadd %s1165, 0
          %s1175 = sadd.s32 %s25, %s1172
          %s1176 = smul.addr %s23, 32
          %s1177 = sadd.s32 %s1175, %s1176
          %s1178 = smul.addr %s1177, 8
          %s1179 = scalar_lea.hbm %s4, %s1178
          %s1180 = sshll.u32 %s1168, 4
          %s1181 = int_to_ptr.vmem [resolvable:$true] %s1180
          %s1182 = sshll.u32 %s1179, 4
          %s1183 = int_to_ptr.hbm [resolvable:$true] %s1182
          %1188 = dma.vmem_to_hbm [thread:$0]  %s1181, 2048, %s1183, %s1165, 128, 128, 8
        $region40: #{tpu_custom_call.1} parent=35 // pred_fallthru
          _
      $region36: #{tpu_custom_call.1} parent=5 // pred_fallthru
        _
      %p1189 = scmp.le.s32.totalorder 2, %s13
      // Predicated region
      $region41: #{tpu_custom_call.1} parent=5 // pred_check
        %p1190 = pneg %p1189
      $region42: #{tpu_custom_call.1} parent=5 // pred_check_branch
        %1192 = sbr.rel (%p1190) target = $region44
      $region43: #{tpu_custom_call.1} parent=5 // pred_region
        %s1193 = ssub.s32 %s13, 2
        // Predicated region
        $region45: #{tpu_custom_call.1} parent=43 // pred_check
          %p1194 = pneg %p177
        $region46: #{tpu_custom_call.1} parent=43 // pred_check_branch
          %1196 = sbr.rel (%p1194) target = $region48
        $region47: #{tpu_custom_call.1} parent=43 // pred_region
          %s1197 = sand.u32 %s162, 1
          %s1198 = scalar_lea.sflag [#allocation3], %s1197
          %s1199 = sand.u32 %s162, 1
          %s1200 = smul.addr %s1199, 128
          %s1201 = scalar_lea.vmem [#allocation2], %s1200
          %1203 = dma.done %s1198, 2048
        $region48: #{tpu_custom_call.1} parent=43 // pred_fallthru
          _
      $region44: #{tpu_custom_call.1} parent=5 // pred_fallthru
        _
    $region6: #{tpu_custom_call.1} parent=1 // loop_footer
      %s17 = sadd.s32 1, %s13
    $region7: #{tpu_custom_call.1} parent=1 // loop_footer_branch
      %12 = sbr.rel target = $region3
    $region8: #{tpu_custom_call.1} parent=1 // loop_exit
      _
    %1204 = vsyncpa [#allocation3], 1
    %s1205 = scalar_lea.sflag [#allocation3], 1
    %1206 = vsyncpa %s1205, 1

</llo_original>
